<compile_context>
chip_gen: v5e
topology: v5e:2x2
jax: 0.10.0
libtpu: 0.0.40
codegen_flags: <defaults>
</compile_context>

<pallas_src>
import functools

import jax
import jax.numpy as jnp
import numpy as np
from jax.experimental import pallas as pl
from jax.experimental.pallas import tpu as pltpu

_GOLDEN = 0x9E3779B9  # seed-mixing constant


def _mix_u32(x):
    """lowbias32-style 32-bit integer mixer (pure jnp, wraps mod 2^32)."""
    x = x ^ (x >> 16)
    x = x * jnp.uint32(0x7FEB352D)
    x = x ^ (x >> 15)
    x = x * jnp.uint32(0x846CA68B)
    x = x ^ (x >> 16)
    return x


def _keep_threshold(keep_prob):
    return np.uint32(min(int(round(keep_prob * 2.0 ** 32)), 2 ** 32 - 1))


def _weight_drop_linear_kernel(seed_ref, x_ref, w_ref, b_ref, o_ref,
                               *, p, variational, block_out, in_features):
    """One OUT-tile: dropout-mask the weight tile, then x @ w_tile^T + b_tile."""
    w = w_ref[...].astype(jnp.float32)                       # [TN, IN]

    if p > 0.0:
        keep_prob = 1.0 - p
        thr = jnp.uint32(_keep_threshold(keep_prob))
        inv_keep = jnp.float32(1.0 / keep_prob)
        seed = seed_ref[0].astype(jnp.uint32) * jnp.uint32(_GOLDEN)
        row_off = (pl.program_id(0) * block_out).astype(jnp.uint32)

        if variational:
            # One Bernoulli draw per output row, broadcast over IN:
            # single [TN, 1] scale column, one broadcast multiply.
            rows = jax.lax.broadcasted_iota(jnp.uint32, (w.shape[0], 1), 0)
            h = _mix_u32((rows + row_off) ^ seed)
            scale = jnp.where(h < thr, inv_keep, 0.0)          # [TN, 1] f32
            w = w * scale
        else:
            # Elementwise dropout; compare in the integer domain.
            rows = jax.lax.broadcasted_iota(jnp.uint32, w.shape, 0) + row_off
            cols = jax.lax.broadcasted_iota(jnp.uint32, w.shape, 1)
            idx = rows * jnp.uint32(in_features) + cols
            keep = _mix_u32(idx ^ seed) < thr
            w = jnp.where(keep, w * inv_keep, 0.0)

    # y = x @ w^T  via dot_general contracting last dims (no transpose of w).
    y = jax.lax.dot_general(
        x_ref[...].astype(jnp.float32), w,
        dimension_numbers=(((1,), (1,)), ((), ())),
        preferred_element_type=jnp.float32)
    y = y + b_ref[...].astype(jnp.float32)
    o_ref[...] = y.astype(o_ref.dtype)


def weight_drop_linear(x, w_raw, b, seed, *, p=0.5, variational=False,
                       block_out=128):
    """WeightDrop-wrapped Linear forward. x:[B,IN], w_raw:[OUT,IN], b:[OUT]."""
    B, IN = x.shape
    OUT = w_raw.shape[0]
    if OUT % block_out != 0:
        block_out = OUT                                   # fall back to one tile
    n_tiles = OUT // block_out

    b2d = b.reshape(1, OUT)
    seed_arr = jnp.asarray([seed], dtype=jnp.int32)

    kernel = functools.partial(
        _weight_drop_linear_kernel, p=float(p), variational=bool(variational),
        block_out=block_out, in_features=IN)

    itemsize = jnp.dtype(x.dtype).itemsize
    cost = pl.CostEstimate(
        flops=2 * B * IN * OUT,
        transcendentals=0,
        bytes_accessed=(OUT * IN + B * IN + B * OUT + OUT) * itemsize)

    fn = pl.pallas_call(
        kernel,
        out_shape=jax.ShapeDtypeStruct((B, OUT), x.dtype),
        grid_spec=pltpu.PrefetchScalarGridSpec(
            num_scalar_prefetch=1,                     # seed lands in SMEM
            grid=(n_tiles,),
            in_specs=[
                pl.BlockSpec((B, IN), lambda j, s: (0, 0)),          # x resident
                pl.BlockSpec((block_out, IN), lambda j, s: (j, 0)),  # weight tile
                pl.BlockSpec((1, block_out), lambda j, s: (0, j)),   # bias tile
            ],
            out_specs=pl.BlockSpec((B, block_out), lambda j, s: (0, j)),
        ),
        compiler_params=pltpu.CompilerParams(
            dimension_semantics=("parallel",)),
        cost_estimate=cost,
    )
    return fn(seed_arr, x, w_raw, b2d)


def _reference(x, w_raw, b, seed, *, p, variational):
    """Pure-JAX reference with the same hash-derived dropout mask."""
    OUT, IN = w_raw.shape
    if p == 0.0:
        w = w_raw
    else:
        keep_prob = 1.0 - p
        thr = jnp.uint32(_keep_threshold(keep_prob))
        seed_u = jnp.uint32(np.uint32(seed & 0xFFFFFFFF)) * jnp.uint32(_GOLDEN)
        if variational:
            rows = jnp.arange(OUT, dtype=jnp.uint32)[:, None]
            keep = _mix_u32(rows ^ seed_u) < thr                 # [OUT, 1]
        else:
            rows = jnp.arange(OUT, dtype=jnp.uint32)[:, None]
            cols = jnp.arange(IN, dtype=jnp.uint32)[None, :]
            keep = _mix_u32((rows * jnp.uint32(IN) + cols) ^ seed_u) < thr
        w = jnp.where(keep, w_raw / keep_prob, 0.0)
    return x @ w.T + b[None, :]


if __name__ == "__main__":
    # Small shapes consistent with WeightDrop(nn.Linear(IN, OUT)).
    B, IN, OUT = 8, 128, 256
    p = 0.5

    key = jax.random.PRNGKey(0)
    kx, kw, kb = jax.random.split(key, 3)

    bound = 1.0 / float(np.sqrt(IN))
    x = jax.random.normal(kx, (B, IN), dtype=jnp.float32)
    w_raw = jax.random.uniform(kw, (OUT, IN), dtype=jnp.float32,
                               minval=-bound, maxval=bound)
    b = jax.random.uniform(kb, (OUT,), dtype=jnp.float32,
                           minval=-bound, maxval=bound)

    # Standard (elementwise) weight drop, training=True.
    y = weight_drop_linear(x, w_raw, b, seed=1234, p=p, variational=False)
    jax.block_until_ready(y)
    y_ref = _reference(x, w_raw, b, 1234, p=p, variational=False)
    np.testing.assert_allclose(np.asarray(y), np.asarray(y_ref),
                               rtol=1e-2, atol=1e-2)

    # Variational variant (per-output-row mask).
    y_var = weight_drop_linear(x, w_raw, b, seed=1234, p=p, variational=True)
    jax.block_until_ready(y_var)
    y_var_ref = _reference(x, w_raw, b, 1234, p=p, variational=True)
    np.testing.assert_allclose(np.asarray(y_var), np.asarray(y_var_ref),
                               rtol=1e-2, atol=1e-2)

    assert y.shape == (B, OUT) and y_var.shape == (B, OUT)
    print("KERNEL_OK")
</pallas_src>

<mosaic_0001>
module attributes {stable_mosaic.version = 11 : i64} {
  func.func @_weight_drop_linear_kernel(%arg0: i32, %arg1: memref<1xi32, #tpu.memory_space<smem>>, %arg2: memref<8x128xf32, #tpu.memory_space<vmem>>, %arg3: memref<128x128xf32, #tpu.memory_space<vmem>>, %arg4: memref<1x128xf32, #tpu.memory_space<vmem>>, %arg5: memref<8x128xf32, #tpu.memory_space<vmem>>) attributes {dimension_semantics = [#tpu.dimension_semantics<parallel>], iteration_bounds = array<i64: 2>, scalar_prefetch = 1 : i64, scratch_operands = 0 : i64, tpu.core_type = #tpu.core_type<tc>, window_params = [{pipeline_mode = #tpu.pipeline_mode<synchronous>, transform_indices = @transform_0, window_bounds = array<i64: 8, 128>}, {transform_indices = @transform_1, window_bounds = array<i64: 128, 128>}, {transform_indices = @transform_2, window_bounds = array<i64: 1, 128>}, {transform_indices = @transform_3, window_bounds = array<i64: 8, 128>}]} {
    %c0 = arith.constant 0 : index
    %c0_0 = arith.constant 0 : index
    %0 = vector.load %arg3[%c0, %c0_0] : memref<128x128xf32, #tpu.memory_space<vmem>>, vector<128x128xf32>
    %c0_1 = arith.constant 0 : index
    %1 = memref.load %arg1[%c0_1] : memref<1xi32, #tpu.memory_space<smem>>
    %c-1640531527_i32 = arith.constant -1640531527 : i32
    %2 = arith.muli %1, %c-1640531527_i32 : i32
    %c128_i32 = arith.constant 128 : i32
    %3 = arith.muli %arg0, %c128_i32 : i32
    %4 = tpu.iota {dimensions = array<i32: 0>} : vector<128x128xi32>
    %5 = vector.broadcast %3 : i32 to vector<128x128xi32>
    %6 = arith.addi %4, %5 : vector<128x128xi32>
    %7 = tpu.iota {dimensions = array<i32: 1>} : vector<128x128xi32>
    %c128_i32_2 = arith.constant 128 : i32
    %8 = vector.broadcast %c128_i32_2 : i32 to vector<128x128xi32>
    %9 = arith.muli %6, %8 : vector<128x128xi32>
    %10 = arith.addi %9, %7 : vector<128x128xi32>
    %11 = vector.broadcast %2 : i32 to vector<128x128xi32>
    %12 = arith.xori %10, %11 : vector<128x128xi32>
    %c16_i32 = arith.constant 16 : i32
    %13 = vector.broadcast %c16_i32 : i32 to vector<128x128xi32>
    %14 = arith.shrui %12, %13 : vector<128x128xi32>
    %15 = arith.xori %12, %14 : vector<128x128xi32>
    %c2146121005_i32 = arith.constant 2146121005 : i32
    %16 = vector.broadcast %c2146121005_i32 : i32 to vector<128x128xi32>
    %17 = arith.muli %15, %16 : vector<128x128xi32>
    %c15_i32 = arith.constant 15 : i32
    %18 = vector.broadcast %c15_i32 : i32 to vector<128x128xi32>
    %19 = arith.shrui %17, %18 : vector<128x128xi32>
    %20 = arith.xori %17, %19 : vector<128x128xi32>
    %c-2073254261_i32 = arith.constant -2073254261 : i32
    %21 = vector.broadcast %c-2073254261_i32 : i32 to vector<128x128xi32>
    %22 = arith.muli %20, %21 : vector<128x128xi32>
    %c16_i32_3 = arith.constant 16 : i32
    %23 = vector.broadcast %c16_i32_3 : i32 to vector<128x128xi32>
    %24 = arith.shrui %22, %23 : vector<128x128xi32>
    %25 = arith.xori %22, %24 : vector<128x128xi32>
    %c-2147483648_i32 = arith.constant -2147483648 : i32
    %26 = vector.broadcast %c-2147483648_i32 : i32 to vector<128x128xi32>
    %27 = arith.cmpi ult, %25, %26 : vector<128x128xi32>
    %cst = arith.constant 2.000000e+00 : f32
    %28 = vector.broadcast %cst : f32 to vector<128x128xf32>
    %29 = arith.mulf %0, %28 : vector<128x128xf32>
    %cst_4 = arith.constant 0.000000e+00 : f32
    %30 = vector.broadcast %cst_4 : f32 to vector<128x128xf32>
    %31 = arith.select %27, %29, %30 : vector<128x128xi1>, vector<128x128xf32>
    %c0_5 = arith.constant 0 : index
    %c0_6 = arith.constant 0 : index
    %32 = vector.load %arg2[%c0_5, %c0_6] : memref<8x128xf32, #tpu.memory_space<vmem>>, vector<8x128xf32>
    %cst_7 = arith.constant dense<0.000000e+00> : vector<8x128xf32>
    %33 = tpu.matmul %32, %31, %cst_7 {dimension_numbers = #tpu.dot_dimension_numbers<[1], [1], [0], [0], [0, 0, 1, 0], [], []>} : vector<8x128xf32>, vector<128x128xf32>, vector<8x128xf32> -> vector<8x128xf32>
    %c0_8 = arith.constant 0 : index
    %c0_9 = arith.constant 0 : index
    %34 = vector.load %arg4[%c0_8, %c0_9] : memref<1x128xf32, #tpu.memory_space<vmem>>, vector<1x128xf32>
    %35 = vector.broadcast %34 : vector<1x128xf32> to vector<8x128xf32>
    %36 = arith.addf %33, %35 : vector<8x128xf32>
    %c0_10 = arith.constant 0 : index
    %c0_11 = arith.constant 0 : index
    %37 = vector.load %arg5[%c0_10, %c0_11] : memref<8x128xf32, #tpu.memory_space<vmem>>, vector<8x128xf32>
    tpu.vector_store %arg5[%c0_10, %c0_11], %36 {strides = array<i32>} : memref<8x128xf32, #tpu.memory_space<vmem>>, vector<8x128xf32>,
    return
  }
  func.func @transform_0(%arg0: i32, %arg1: memref<1xi32, #tpu.memory_space<smem>>) -> (i32, i32) {
    %c0_i32 = arith.constant 0 : i32
    %c0_i32_0 = arith.constant 0 : i32
    %c0_i32_1 = arith.constant 0 : i32
    return %c0_i32, %c0_i32_0 : i32, i32
  }
  func.func @transform_1(%arg0: i32, %arg1: memref<1xi32, #tpu.memory_space<smem>>) -> (i32, i32) {
    %c0_i32 = arith.constant 0 : i32
    %c0_i32_0 = arith.constant 0 : i32
    return %arg0, %c0_i32 : i32, i32
  }
  func.func @transform_2(%arg0: i32, %arg1: memref<1xi32, #tpu.memory_space<smem>>) -> (i32, i32) {
    %c0_i32 = arith.constant 0 : i32
    %c0_i32_0 = arith.constant 0 : i32
    return %c0_i32, %arg0 : i32, i32
  }
  func.func @transform_3(%arg0: i32, %arg1: memref<1xi32, #tpu.memory_space<smem>>) -> (i32, i32) {
    %c0_i32 = arith.constant 0 : i32
    %c0_i32_0 = arith.constant 0 : i32
    return %c0_i32, %arg0 : i32, i32
  }
}

</mosaic_0001>

<llo_original>
// kernel: tpu_custom_call.1
$region0: #{tpu_custom_call.1}
  #allocation0 [shape = 'u32[]', space=smem, size = 0x4, offset = 0x4, fixed_abs, tag = 'smem constant byte address 0x4 - core index']
  #allocation1 [shape = 'u32[72,128]{1,0:T(1,128)}', space=vmem, size = 0x9000, scoped, tag = 'internal scratch']
  #allocation2 [shape = 's32[1]{0}', space=sflag, size = 0x4, scoped, tag = 'scoped memory for tpu_custom_call.1']
  #allocation3 [shape = 's32[1]{0:T(128)S(6)}', space=smem, size = 0x200, scoped, tag = 'prefetched SMEM operand 0']
  %s0 = inlined_call_operand.<no memory space> [shape: s32[1], index: 0, kind: input, shape index: {}]
  %s1 = inlined_call_operand.hbm [shape: f32[8,128], index: 1, kind: input, shape index: {}]
  %s2 = inlined_call_operand.hbm [shape: f32[256,128], index: 2, kind: input, shape index: {}]
  %s3 = inlined_call_operand.vmem [shape: f32[1,256], index: 3, kind: input, shape index: {}]
  %s4 = inlined_call_operand.hbm [shape: f32[8,256], index: 4, kind: output, shape index: {}]
  %s5 = sld [smem:[#allocation0]]
  $region53: #{tpu_custom_call.1} parent=0
    _
  %s7 = ssub.s32 1, %s5
  %s8 = scalar_select 0, %s7, %s5
  %9 = sst [smem:[#allocation3]] %s0
  $region1: #{tpu_custom_call.1} parent=0
    #allocation4 [shape = 'u8[4096]{0}', space=vmem, size = 0x1000, scoped, tag = 'input window, operand 1, single buffered']
    #allocation5 [shape = 's32[2]{0}', space=sflag, size = 0x8, scoped, tag = 'scoped memory for tpu_custom_call.1']
    #allocation6 [shape = 's32[2]{0}', space=sflag, size = 0x8, scoped, tag = 'scoped memory for tpu_custom_call.1']
    #allocation7 [shape = 'u8[131072]{0}', space=vmem, size = 0x20000, scoped, tag = 'input window, operand 2']
    #allocation8 [shape = 's32[2]{0}', space=sflag, size = 0x8, scoped, tag = 'scoped memory for tpu_custom_call.1']
    #allocation9 [shape = 'u8[8192]{0}', space=vmem, size = 0x2000, scoped, tag = 'output window, operand 0']
    %10 = vsyncpa [#allocation5], 0
    %11 = vsyncpa [#allocation8], 0
    %s12 = scalar_lea.sflag [#allocation8], 1
    %13 = vsyncpa %s12, 0
    %14 = vsyncpa [#allocation6], 0
    %s15 = scalar_lea.sflag [#allocation6], 1
    %16 = vsyncpa %s15, 0
    loop: start=0, step=1, limit=4
    $region2: #{tpu_custom_call.1} parent=1 // loop_pre_header
      _
    $region3: #{tpu_custom_call.1} parent=1 // loop_header
      %s18 = sphi 0, %s22
      %p19 = scmp.ge.s32.totalorder %s18, 4
      %s26 = sphi 0, %s26
      %s28 = sphi 0, %s26
      %s29 = sphi 0, %s28
      %s43 = sphi 0, %s29
      %s49 = sphi 0, %s51
      %s52 = sphi 0, %s49
      %s53 = sphi 0, %s52
      %s69 = sphi 0, %s53
      %s75 = sphi 0, %s77
      %s78 = sphi 0, %s75
      %s79 = sphi 0, %s78
      %s95 = sphi 0, %s79
      %s101 = sphi 0, %s103
      %s104 = sphi 0, %s101
      %s105 = sphi 0, %s104
      %s121 = sphi 0, %s105
    $region4: #{tpu_custom_call.1} parent=1 // loop_header_branch
      %21 = sbr.rel (%p19) target = $region8
    $region5: #{tpu_custom_call.1} parent=1 // loop_body
      %s23 = ssub.s32 %s18, 1
      %s24 = ssub.s32 %s18, 2
      %s25 = sadd.s32 %s18, 1
      %s27 = sadd.s32 %s26, 1
      %p30 = scmp.eq.s32.totalorder %s18, 1
      %p31 = scmp.ne.s32.totalorder %s26, %s28
      %p32 = scmp.eq.s32.totalorder %s18, 0
      %p33 = por %p31, %p32
      %p34 = scmp.ne.s32.totalorder %s26, %s28
      %p35 = scmp.eq.s32.totalorder %s23, 1
      %p36 = por %p34, %p35
      %p37 = scmp.ne.s32.totalorder %s28, %s29
      %p38 = scmp.eq.s32.totalorder %s23, 0
      %p39 = por %p37, %p38
      %p40 = scmp.ne.s32.totalorder %s28, %s29
      %p41 = scmp.eq.s32.totalorder %s24, 1
      %p42 = por %p40, %p41
      %p44 = scmp.ne.s32.totalorder %s29, %s43
      %p45 = scmp.eq.s32.totalorder %s24, 0
      %p46 = por %p44, %p45
      %s47 = ssub.s32 %s18, %s25
      %p48 = scmp.eq.s32.totalorder %s47, 0
      %s50 = sadd.s32 %s49, 1
      %s51 = scalar_select %p48, %s49, %s50
      %p54 = pneg %p48
      %p55 = scmp.eq.s32.totalorder %s18, 1
      %p56 = por %p54, %p55
      %p57 = scmp.ne.s32.totalorder %s49, %s52
      %p58 = scmp.eq.s32.totalorder %s18, 0
      %p59 = por %p57, %p58
      %p60 = scmp.ne.s32.totalorder %s49, %s52
      %p61 = scmp.eq.s32.totalorder %s23, 1
      %p62 = por %p60, %p61
      %p63 = scmp.ne.s32.totalorder %s52, %s53
      %p64 = scmp.eq.s32.totalorder %s23, 0
      %p65 = por %p63, %p64
      %p66 = scmp.ne.s32.totalorder %s52, %s53
      %p67 = scmp.eq.s32.totalorder %s24, 1
      %p68 = por %p66, %p67
      %p70 = scmp.ne.s32.totalorder %s53, %s69
      %p71 = scmp.eq.s32.totalorder %s24, 0
      %p72 = por %p70, %p71
      %s73 = ssub.s32 %s18, %s25
      %p74 = scmp.eq.s32.totalorder %s73, 0
      %s76 = sadd.s32 %s75, 1
      %s77 = scalar_select %p74, %s75, %s76
      %p80 = pneg %p74
      %p81 = scmp.eq.s32.totalorder %s18, 1
      %p82 = por %p80, %p81
      %p83 = scmp.ne.s32.totalorder %s75, %s78
      %p84 = scmp.eq.s32.totalorder %s18, 0
      %p85 = por %p83, %p84
      %p86 = scmp.ne.s32.totalorder %s75, %s78
      %p87 = scmp.eq.s32.totalorder %s23, 1
      %p88 = por %p86, %p87
      %p89 = scmp.ne.s32.totalorder %s78, %s79
      %p90 = scmp.eq.s32.totalorder %s23, 0
      %p91 = por %p89, %p90
      %p92 = scmp.ne.s32.totalorder %s78, %s79
      %p93 = scmp.eq.s32.totalorder %s24, 1
      %p94 = por %p92, %p93
      %p96 = scmp.ne.s32.totalorder %s79, %s95
      %p97 = scmp.eq.s32.totalorder %s24, 0
      %p98 = por %p96, %p97
      %s99 = ssub.s32 %s18, %s25
      %p100 = scmp.eq.s32.totalorder %s99, 0
      %s102 = sadd.s32 %s101, 1
      %s103 = scalar_select %p100, %s101, %s102
      %p106 = pneg %p100
      %p107 = scmp.eq.s32.totalorder %s18, 1
      %p108 = por %p106, %p107
      %p109 = scmp.ne.s32.totalorder %s101, %s104
      %p110 = scmp.eq.s32.totalorder %s18, 0
      %p111 = por %p109, %p110
      %p112 = scmp.ne.s32.totalorder %s101, %s104
      %p113 = scmp.eq.s32.totalorder %s23, 1
      %p114 = por %p112, %p113
      %p115 = scmp.ne.s32.totalorder %s104, %s105
      %p116 = scmp.eq.s32.totalorder %s23, 0
      %p117 = por %p115, %p116
      %p118 = scmp.ne.s32.totalorder %s104, %s105
      %p119 = scmp.eq.s32.totalorder %s24, 1
      %p120 = por %p118, %p119
      %p122 = scmp.ne.s32.totalorder %s105, %s121
      %p123 = scmp.eq.s32.totalorder %s24, 0
      %p124 = por %p122, %p123
      %p125 = scmp.le.s32.totalorder 1, %s18
      %p126 = scmp.lt.s32.totalorder %s18, 3
      %p127 = pnand %p125, %p126
      %p128 = pneg %p127
      // Predicated region
      $region9: #{tpu_custom_call.1} parent=5 // pred_check
        _
      $region10: #{tpu_custom_call.1} parent=5 // pred_check_branch
        %130 = sbr.rel (%p127) target = $region12
      $region11: #{tpu_custom_call.1} parent=5 // pred_region
        %s131 = ssub.s32 %s18, 1
        // Predicated region
        $region13: #{tpu_custom_call.1} parent=11 // pred_check
          %p132 = pneg %p39
        $region14: #{tpu_custom_call.1} parent=11 // pred_check_branch
          %134 = sbr.rel (%p132) target = $region16
        $region15: #{tpu_custom_call.1} parent=11 // pred_region
          %136 = vsyncadd [#allocation5], 0
          %s138 = sshll.u32 %s1, 4
          %s139 = int_to_ptr.hbm [resolvable:$true] %s138
          %s140 = sshll.u32 [#allocation4], 4
          %s141 = int_to_ptr.vmem [resolvable:$true] %s140
          %143 = dma.hbm_to_vmem [thread:$0]  %s139, 128, %s141, [#allocation5]
        $region16: #{tpu_custom_call.1} parent=11 // pred_fallthru
          _
      $region12: #{tpu_custom_call.1} parent=5 // pred_fallthru
        _
      %p144 = scmp.lt.s32.totalorder %s18, 2
      // Predicated region
      $region17: #{tpu_custom_call.1} parent=5 // pred_check
        %p145 = pneg %p144
      $region18: #{tpu_custom_call.1} parent=5 // pred_check_branch
        %147 = sbr.rel (%p145) target = $region20
      $region19: #{tpu_custom_call.1} parent=5 // pred_region
        // Predicated region
        $region21: #{tpu_custom_call.1} parent=19 // pred_check
          %p148 = pneg %p59
        $region22: #{tpu_custom_call.1} parent=19 // pred_check_branch
          %150 = sbr.rel (%p148) target = $region24
        $region23: #{tpu_custom_call.1} parent=19 // pred_region
          %s151 = sand.u32 %s49, 1
          %s152 = scalar_lea.sflag [#allocation8], %s151
          %s153 = sand.u32 %s49, 1
          %s154 = smul.addr %s153, 128
          %s155 = scalar_lea.vmem [#allocation7], %s154
          %s156 = smul.u32 16, %s18
          %158 = vsyncadd %s152, 0
          %s159 = smul.addr %s156, 8
          %s160 = scalar_lea.hbm %s2, %s159
          %s161 = sshll.u32 %s160, 4
          %s162 = int_to_ptr.hbm [resolvable:$true] %s161
          %s163 = sshll.u32 %s155, 4
          %s164 = int_to_ptr.vmem [resolvable:$true] %s163
          %169 = dma.hbm_to_vmem [thread:$0]  %s162, 2048, %s164, %s152, 128, 128, 8
        $region24: #{tpu_custom_call.1} parent=19 // pred_fallthru
          _
        // Predicated region
        $region25: #{tpu_custom_call.1} parent=19 // pred_check
          %p170 = pneg %p85
        $region26: #{tpu_custom_call.1} parent=19 // pred_check_branch
          %172 = sbr.rel (%p170) target = $region28
        $region27: #{tpu_custom_call.1} parent=19 // pred_region
          %p173 = scmp.lt.s32.totalorder %s18, 1
          %s174 = scalar_select %p173, %s18, 1
          %s175 = scalar_lea.vmem %s3, %s174
        $region28: #{tpu_custom_call.1} parent=19 // pred_fallthru
          _
      $region20: #{tpu_custom_call.1} parent=5 // pred_fallthru
        _
      %p176 = scmp.le.s32.totalorder 1, %s18
      %p177 = scmp.lt.s32.totalorder %s18, 3
      %p178 = pnand %p176, %p177
      %p179 = pneg %p178
      // Predicated region
      $region29: #{tpu_custom_call.1} parent=5 // pred_check
        _
      $region30: #{tpu_custom_call.1} parent=5 // pred_check_branch
        %181 = sbr.rel (%p178) target = $region32
      $region31: #{tpu_custom_call.1} parent=5 // pred_region
        %s182 = ssub.s32 %s18, 1
        // Predicated region
        $region33: #{tpu_custom_call.1} parent=31 // pred_check
          %p183 = pneg %p39
        $region34: #{tpu_custom_call.1} parent=31 // pred_check_branch
          %185 = sbr.rel (%p183) target = $region36
        $region35: #{tpu_custom_call.1} parent=31 // pred_region
          %187 = dma.done [#allocation5], 128
        $region36: #{tpu_custom_call.1} parent=31 // pred_fallthru
          _
        %s188 = sand.u32 %s52, 1
        %s189 = scalar_lea.sflag [#allocation8], %s188
        %s190 = sand.u32 %s52, 1
        %s191 = smul.addr %s190, 128
        %s192 = scalar_lea.vmem [#allocation7], %s191
        // Predicated region
        $region37: #{tpu_custom_call.1} parent=31 // pred_check
          %p193 = pneg %p65
        $region38: #{tpu_custom_call.1} parent=31 // pred_check_branch
          %195 = sbr.rel (%p193) target = $region40
        $region39: #{tpu_custom_call.1} parent=31 // pred_region
          %197 = dma.done %s189, 2048
        $region40: #{tpu_custom_call.1} parent=31 // pred_fallthru
          _
        %p198 = pneg %p39
        %p199 = pneg %p36
        %s200 = sand.u32 %s52, 1
        %s201 = scalar_lea.sflag [#allocation8], %s200
        %s202 = sand.u32 %s52, 1
        %s203 = smul.addr %s202, 128
        %s204 = scalar_lea.vmem [#allocation7], %s203
        %p205 = pneg %p65
        %p206 = pneg %p62
        %p207 = scmp.lt.s32.totalorder %s23, 1
        %s208 = scalar_select %p207, %s23, 1
        %s209 = scalar_lea.vmem %s3, %s208
        %p210 = pneg %p91
        %p211 = pneg %p88
        %p212 = pneg %p117
        %p213 = pneg %p114
        %s214 = sand.u32 %s104, 1
        %s215 = scalar_lea.sflag [#allocation6], %s214
        %s216 = sand.u32 %s104, 1
        %s217 = smul.addr %s216, 8
        %s218 = scalar_lea.vmem [#allocation9], %s217
        %s219 = smul.u32 16, %s23
        %p220 = scmp.lt.s32.totalorder %s23, 1
        %s221 = scalar_select %p220, %s23, 1
        %s222 = scalar_lea.vmem %s3, %s221
        %v223 = vld [vmem:[%s192] sm:$0xff]
        %v224 = vld [vmem:[%s192 + $0x8] sm:$0xff]
        %v225 = vld [vmem:[%s192 + $0x10] sm:$0xff]
        %v226 = vld [vmem:[%s192 + $0x18] sm:$0xff]
        %v227 = vld [vmem:[%s192 + $0x20] sm:$0xff]
        %v228 = vld [vmem:[%s192 + $0x28] sm:$0xff]
        %v229 = vld [vmem:[%s192 + $0x30] sm:$0xff]
        %v230 = vld [vmem:[%s192 + $0x38] sm:$0xff]
        %v231 = vld [vmem:[%s192 + $0x40] sm:$0xff]
        %v232 = vld [vmem:[%s192 + $0x48] sm:$0xff]
        %v233 = vld [vmem:[%s192 + $0x50] sm:$0xff]
        %v234 = vld [vmem:[%s192 + $0x58] sm:$0xff]
        %v235 = vld [vmem:[%s192 + $0x60] sm:$0xff]
        %v236 = vld [vmem:[%s192 + $0x68] sm:$0xff]
        %v237 = vld [vmem:[%s192 + $0x70] sm:$0xff]
        %v238 = vld [vmem:[%s192 + $0x78] sm:$0xff]
        %s239 = sld [smem:[#allocation3]]
        %s240 = smul.u32 %s239, 2654435769
        %s241 = smul.u32 %s23, 128
        %v242 = vlaneseq
        %v243 = vshrl.u32 %v242, 7
        %v244 = vadd.s32 %v243, 8
        %v245 = vadd.s32 %v243, 16
        %v246 = vadd.s32 %v243, 24
        %v247 = vadd.s32 %v243, 32
        %v248 = vadd.s32 %v243, 40
        %v249 = vadd.s32 %v243, 48
        %v250 = vadd.s32 %v243, 56
        %v251 = vadd.s32 %v243, 64
        %v252 = vadd.s32 %v243, 72
        %v253 = vadd.s32 %v243, 80
        %v254 = vadd.s32 %v243, 88
        %v255 = vadd.s32 %v243, 96
        %v256 = vadd.s32 %v243, 104
        %v257 = vadd.s32 %v243, 112
        %v258 = vadd.s32 %v243, 120
        %v259 = vstv %s241
        %v260 = vadd.s32 %v243, %v259
        %v261 = vadd.s32 %v244, %v259
        %v262 = vadd.s32 %v245, %v259
        %v263 = vadd.s32 %v246, %v259
        %v264 = vadd.s32 %v247, %v259
        %v265 = vadd.s32 %v248, %v259
        %v266 = vadd.s32 %v249, %v259
        %v267 = vadd.s32 %v250, %v259
        %v268 = vadd.s32 %v251, %v259
        %v269 = vadd.s32 %v252, %v259
        %v270 = vadd.s32 %v253, %v259
        %v271 = vadd.s32 %v254, %v259
        %v272 = vadd.s32 %v255, %v259
        %v273 = vadd.s32 %v256, %v259
        %v274 = vadd.s32 %v257, %v259
        %v275 = vadd.s32 %v258, %v259
        %v276 = vlaneseq
        %v277 = vand.u32 %v276, 127
        %v278 = vmul.u32 %v260, 128
        %v279 = vmul.u32 %v261, 128
        %v280 = vmul.u32 %v262, 128
        %v281 = vmul.u32 %v263, 128
        %v282 = vmul.u32 %v264, 128
        %v283 = vmul.u32 %v265, 128
        %v284 = vmul.u32 %v266, 128
        %v285 = vmul.u32 %v267, 128
        %v286 = vmul.u32 %v268, 128
        %v287 = vmul.u32 %v269, 128
        %v288 = vmul.u32 %v270, 128
        %v289 = vmul.u32 %v271, 128
        %v290 = vmul.u32 %v272, 128
        %v291 = vmul.u32 %v273, 128
        %v292 = vmul.u32 %v274, 128
        %v293 = vmul.u32 %v275, 128
        %v294 = vadd.s32 %v278, %v277
        %v295 = vadd.s32 %v279, %v277
        %v296 = vadd.s32 %v280, %v277
        %v297 = vadd.s32 %v281, %v277
        %v298 = vadd.s32 %v282, %v277
        %v299 = vadd.s32 %v283, %v277
        %v300 = vadd.s32 %v284, %v277
        %v301 = vadd.s32 %v285, %v277
        %v302 = vadd.s32 %v286, %v277
        %v303 = vadd.s32 %v287, %v277
        %v304 = vadd.s32 %v288, %v277
        %v305 = vadd.s32 %v289, %v277
        %v306 = vadd.s32 %v290, %v277
        %v307 = vadd.s32 %v291, %v277
        %v308 = vadd.s32 %v292, %v277
        %v309 = vadd.s32 %v293, %v277
        %v310 = vstv %s240
        %v311 = vxor.u32 %v294, %v310
        %v312 = vxor.u32 %v295, %v310
        %v313 = vxor.u32 %v296, %v310
        %v314 = vxor.u32 %v297, %v310
        %v315 = vxor.u32 %v298, %v310
        %v316 = vxor.u32 %v299, %v310
        %v317 = vxor.u32 %v300, %v310
        %v318 = vxor.u32 %v301, %v310
        %v319 = vxor.u32 %v302, %v310
        %v320 = vxor.u32 %v303, %v310
        %v321 = vxor.u32 %v304, %v310
        %v322 = vxor.u32 %v305, %v310
        %v323 = vxor.u32 %v306, %v310
        %v324 = vxor.u32 %v307, %v310
        %v325 = vxor.u32 %v308, %v310
        %v326 = vxor.u32 %v309, %v310
        %v327 = vshrl.u32 %v311, 16
        %v328 = vshrl.u32 %v312, 16
        %v329 = vshrl.u32 %v313, 16
        %v330 = vshrl.u32 %v314, 16
        %v331 = vshrl.u32 %v315, 16
        %v332 = vshrl.u32 %v316, 16
        %v333 = vshrl.u32 %v317, 16
        %v334 = vshrl.u32 %v318, 16
        %v335 = vshrl.u32 %v319, 16
        %v336 = vshrl.u32 %v320, 16
        %v337 = vshrl.u32 %v321, 16
        %v338 = vshrl.u32 %v322, 16
        %v339 = vshrl.u32 %v323, 16
        %v340 = vshrl.u32 %v324, 16
        %v341 = vshrl.u32 %v325, 16
        %v342 = vshrl.u32 %v326, 16
        %v343 = vxor.u32 %v311, %v327
        %v344 = vxor.u32 %v312, %v328
        %v345 = vxor.u32 %v313, %v329
        %v346 = vxor.u32 %v314, %v330
        %v347 = vxor.u32 %v315, %v331
        %v348 = vxor.u32 %v316, %v332
        %v349 = vxor.u32 %v317, %v333
        %v350 = vxor.u32 %v318, %v334
        %v351 = vxor.u32 %v319, %v335
        %v352 = vxor.u32 %v320, %v336
        %v353 = vxor.u32 %v321, %v337
        %v354 = vxor.u32 %v322, %v338
        %v355 = vxor.u32 %v323, %v339
        %v356 = vxor.u32 %v324, %v340
        %v357 = vxor.u32 %v325, %v341
        %v358 = vxor.u32 %v326, %v342
        %v359 = vmul.u32 %v343, 2146121005
        %v360 = vmul.u32 %v344, 2146121005
        %v361 = vmul.u32 %v345, 2146121005
        %v362 = vmul.u32 %v346, 2146121005
        %v363 = vmul.u32 %v347, 2146121005
        %v364 = vmul.u32 %v348, 2146121005
        %v365 = vmul.u32 %v349, 2146121005
        %v366 = vmul.u32 %v350, 2146121005
        %v367 = vmul.u32 %v351, 2146121005
        %v368 = vmul.u32 %v352, 2146121005
        %v369 = vmul.u32 %v353, 2146121005
        %v370 = vmul.u32 %v354, 2146121005
        %v371 = vmul.u32 %v355, 2146121005
        %v372 = vmul.u32 %v356, 2146121005
        %v373 = vmul.u32 %v357, 2146121005
        %v374 = vmul.u32 %v358, 2146121005
        %v375 = vshrl.u32 %v359, 15
        %v376 = vshrl.u32 %v360, 15
        %v377 = vshrl.u32 %v361, 15
        %v378 = vshrl.u32 %v362, 15
        %v379 = vshrl.u32 %v363, 15
        %v380 = vshrl.u32 %v364, 15
        %v381 = vshrl.u32 %v365, 15
        %v382 = vshrl.u32 %v366, 15
        %v383 = vshrl.u32 %v367, 15
        %v384 = vshrl.u32 %v368, 15
        %v385 = vshrl.u32 %v369, 15
        %v386 = vshrl.u32 %v370, 15
        %v387 = vshrl.u32 %v371, 15
        %v388 = vshrl.u32 %v372, 15
        %v389 = vshrl.u32 %v373, 15
        %v390 = vshrl.u32 %v374, 15
        %v391 = vxor.u32 %v359, %v375
        %v392 = vxor.u32 %v360, %v376
        %v393 = vxor.u32 %v361, %v377
        %v394 = vxor.u32 %v362, %v378
        %v395 = vxor.u32 %v363, %v379
        %v396 = vxor.u32 %v364, %v380
        %v397 = vxor.u32 %v365, %v381
        %v398 = vxor.u32 %v366, %v382
        %v399 = vxor.u32 %v367, %v383
        %v400 = vxor.u32 %v368, %v384
        %v401 = vxor.u32 %v369, %v385
        %v402 = vxor.u32 %v370, %v386
        %v403 = vxor.u32 %v371, %v387
        %v404 = vxor.u32 %v372, %v388
        %v405 = vxor.u32 %v373, %v389
        %v406 = vxor.u32 %v374, %v390
        %v407 = vmul.u32 %v391, 2221713035
        %v408 = vmul.u32 %v392, 2221713035
        %v409 = vmul.u32 %v393, 2221713035
        %v410 = vmul.u32 %v394, 2221713035
        %v411 = vmul.u32 %v395, 2221713035
        %v412 = vmul.u32 %v396, 2221713035
        %v413 = vmul.u32 %v397, 2221713035
        %v414 = vmul.u32 %v398, 2221713035
        %v415 = vmul.u32 %v399, 2221713035
        %v416 = vmul.u32 %v400, 2221713035
        %v417 = vmul.u32 %v401, 2221713035
        %v418 = vmul.u32 %v402, 2221713035
        %v419 = vmul.u32 %v403, 2221713035
        %v420 = vmul.u32 %v404, 2221713035
        %v421 = vmul.u32 %v405, 2221713035
        %v422 = vmul.u32 %v406, 2221713035
        %v423 = vshrl.u32 %v407, 16
        %v424 = vshrl.u32 %v408, 16
        %v425 = vshrl.u32 %v409, 16
        %v426 = vshrl.u32 %v410, 16
        %v427 = vshrl.u32 %v411, 16
        %v428 = vshrl.u32 %v412, 16
        %v429 = vshrl.u32 %v413, 16
        %v430 = vshrl.u32 %v414, 16
        %v431 = vshrl.u32 %v415, 16
        %v432 = vshrl.u32 %v416, 16
        %v433 = vshrl.u32 %v417, 16
        %v434 = vshrl.u32 %v418, 16
        %v435 = vshrl.u32 %v419, 16
        %v436 = vshrl.u32 %v420, 16
        %v437 = vshrl.u32 %v421, 16
        %v438 = vshrl.u32 %v422, 16
        %v439 = vxor.u32 %v407, %v423
        %v440 = vxor.u32 %v408, %v424
        %v441 = vxor.u32 %v409, %v425
        %v442 = vxor.u32 %v410, %v426
        %v443 = vxor.u32 %v411, %v427
        %v444 = vxor.u32 %v412, %v428
        %v445 = vxor.u32 %v413, %v429
        %v446 = vxor.u32 %v414, %v430
        %v447 = vxor.u32 %v415, %v431
        %v448 = vxor.u32 %v416, %v432
        %v449 = vxor.u32 %v417, %v433
        %v450 = vxor.u32 %v418, %v434
        %v451 = vxor.u32 %v419, %v435
        %v452 = vxor.u32 %v420, %v436
        %v453 = vxor.u32 %v421, %v437
        %v454 = vxor.u32 %v422, %v438
        %v455 = vadd.s32 %v439, 2147483648
        %vm457 = vcmp.lt.s32.totalorder %v455, 0
        %v458 = vadd.s32 %v440, 2147483648
        %vm460 = vcmp.lt.s32.totalorder %v458, 0
        %v461 = vadd.s32 %v441, 2147483648
        %vm463 = vcmp.lt.s32.totalorder %v461, 0
        %v464 = vadd.s32 %v442, 2147483648
        %vm466 = vcmp.lt.s32.totalorder %v464, 0
        %v467 = vadd.s32 %v443, 2147483648
        %vm469 = vcmp.lt.s32.totalorder %v467, 0
        %v470 = vadd.s32 %v444, 2147483648
        %vm472 = vcmp.lt.s32.totalorder %v470, 0
        %v473 = vadd.s32 %v445, 2147483648
        %vm475 = vcmp.lt.s32.totalorder %v473, 0
        %v476 = vadd.s32 %v446, 2147483648
        %vm478 = vcmp.lt.s32.totalorder %v476, 0
        %v479 = vadd.s32 %v447, 2147483648
        %vm481 = vcmp.lt.s32.totalorder %v479, 0
        %v482 = vadd.s32 %v448, 2147483648
        %vm484 = vcmp.lt.s32.totalorder %v482, 0
        %v485 = vadd.s32 %v449, 2147483648
        %vm487 = vcmp.lt.s32.totalorder %v485, 0
        %v488 = vadd.s32 %v450, 2147483648
        %vm490 = vcmp.lt.s32.totalorder %v488, 0
        %v491 = vadd.s32 %v451, 2147483648
        %vm493 = vcmp.lt.s32.totalorder %v491, 0
        %v494 = vadd.s32 %v452, 2147483648
        %vm496 = vcmp.lt.s32.totalorder %v494, 0
        %v497 = vadd.s32 %v453, 2147483648
        %vm499 = vcmp.lt.s32.totalorder %v497, 0
        %v500 = vadd.s32 %v454, 2147483648
        %vm502 = vcmp.lt.s32.totalorder %v500, 0
        %v503 = vmul.f32 %v223, 2.0
        %v504 = vmul.f32 %v224, 2.0
        %v505 = vmul.f32 %v225, 2.0
        %v506 = vmul.f32 %v226, 2.0
        %v507 = vmul.f32 %v227, 2.0
        %v508 = vmul.f32 %v228, 2.0
        %v509 = vmul.f32 %v229, 2.0
        %v510 = vmul.f32 %v230, 2.0
        %v511 = vmul.f32 %v231, 2.0
        %v512 = vmul.f32 %v232, 2.0
        %v513 = vmul.f32 %v233, 2.0
        %v514 = vmul.f32 %v234, 2.0
        %v515 = vmul.f32 %v235, 2.0
        %v516 = vmul.f32 %v236, 2.0
        %v517 = vmul.f32 %v237, 2.0
        %v518 = vmul.f32 %v238, 2.0
        %v519 = vsel %vm457, %v503, 0.0
        %v520 = vsel %vm460, %v504, 0.0
        %v521 = vsel %vm463, %v505, 0.0
        %v522 = vsel %vm466, %v506, 0.0
        %v523 = vsel %vm469, %v507, 0.0
        %v524 = vsel %vm472, %v508, 0.0
        %v525 = vsel %vm475, %v509, 0.0
        %v526 = vsel %vm478, %v510, 0.0
        %v527 = vsel %vm481, %v511, 0.0
        %v528 = vsel %vm484, %v512, 0.0
        %v529 = vsel %vm487, %v513, 0.0
        %v530 = vsel %vm490, %v514, 0.0
        %v531 = vsel %vm493, %v515, 0.0
        %v532 = vsel %vm496, %v516, 0.0
        %v533 = vsel %vm499, %v517, 0.0
        %v534 = vsel %vm502, %v518, 0.0
        %v535 = vld [vmem:[#allocation4] sm:$0xff]
        %v536 = vld [vmem:[%s222] sm:$0x1]
        %v538 = vperm.slane %v536, 0
        %540 = vmatpush.xpose.msra.mxu0 %v534
        %541 = vmatpush.xpose.msra.mxu0 %v533
        %542 = vmatpush.xpose.msra.mxu0 %v532
        %543 = vmatpush.xpose.msra.mxu0 %v531
        %544 = vmatpush.xpose.msra.mxu0 %v530
        %545 = vmatpush.xpose.msra.mxu0 %v529
        %546 = vmatpush.xpose.msra.mxu0 %v528
        %547 = vmatpush.xpose.msra.mxu0 %v527
        %548 = vmatpush.xpose.msra.mxu0 %v526
        %549 = vmatpush.xpose.msra.mxu0 %v525
        %550 = vmatpush.xpose.msra.mxu0 %v524
        %551 = vmatpush.xpose.msra.mxu0 %v523
        %552 = vmatpush.xpose.msra.mxu0 %v522
        %553 = vmatpush.xpose.msra.mxu0 %v521
        %554 = vmatpush.xpose.msra.mxu0 %v520
        %555 = vmatpush.xpose.msra.mxu0 %v519
        %556 = vmatmul.f32.gmra.mxu0 %v535
        %v557 = vpop.f32.mrf.mxu0
        %v558 = vadd.f32 %v538, %v557
        %559 = vdwg.mxu0
        %560 = vst [vmem:[%s218] sm:$0xff] %v558
        %s561 = sand.u32 %s104, 1
        %s562 = scalar_lea.sflag [#allocation6], %s561
        %s563 = sand.u32 %s104, 1
        %s564 = smul.addr %s563, 8
        %s565 = scalar_lea.vmem [#allocation9], %s564
        // Predicated region
        $region41: #{tpu_custom_call.1} parent=31 // pred_check
          %p566 = pneg %p114
        $region42: #{tpu_custom_call.1} parent=31 // pred_check_branch
          %568 = sbr.rel (%p566) target = $region44
        $region43: #{tpu_custom_call.1} parent=31 // pred_region
          %570 = vsyncadd %s562, 0
          %s571 = smul.addr %s23, 8
          %s572 = scalar_lea.hbm %s4, %s571
          %s574 = sshll.u32 %s565, 4
          %s575 = int_to_ptr.vmem [resolvable:$true] %s574
          %s576 = sshll.u32 %s572, 4
          %s577 = int_to_ptr.hbm [resolvable:$true] %s576
          %579 = dma.vmem_to_hbm [thread:$0]  %s575, 128, %s577, %s562
        $region44: #{tpu_custom_call.1} parent=31 // pred_fallthru
          _
      $region32: #{tpu_custom_call.1} parent=5 // pred_fallthru
        _
      %p580 = scmp.le.s32.totalorder 2, %s18
      // Predicated region
      $region45: #{tpu_custom_call.1} parent=5 // pred_check
        %p581 = pneg %p580
      $region46: #{tpu_custom_call.1} parent=5 // pred_check_branch
        %583 = sbr.rel (%p581) target = $region48
      $region47: #{tpu_custom_call.1} parent=5 // pred_region
        %s584 = ssub.s32 %s18, 2
        // Predicated region
        $region49: #{tpu_custom_call.1} parent=47 // pred_check
          %p585 = pneg %p120
        $region50: #{tpu_custom_call.1} parent=47 // pred_check_branch
          %587 = sbr.rel (%p585) target = $region52
        $region51: #{tpu_custom_call.1} parent=47 // pred_region
          %s588 = sand.u32 %s105, 1
          %s589 = scalar_lea.sflag [#allocation6], %s588
          %s590 = sand.u32 %s105, 1
          %s591 = smul.addr %s590, 8
          %s592 = scalar_lea.vmem [#allocation9], %s591
          %594 = dma.done %s589, 128
        $region52: #{tpu_custom_call.1} parent=47 // pred_fallthru
          _
      $region48: #{tpu_custom_call.1} parent=5 // pred_fallthru
        _
    $region6: #{tpu_custom_call.1} parent=1 // loop_footer
      %s22 = sadd.s32 1, %s18
    $region7: #{tpu_custom_call.1} parent=1 // loop_footer_branch
      %17 = sbr.rel target = $region3
    $region8: #{tpu_custom_call.1} parent=1 // loop_exit
      _
    %595 = vsyncpa [#allocation5], 1
    %s596 = scalar_lea.sflag [#allocation5], 1
    %597 = vsyncpa %s596, 1
    %598 = vsyncpa [#allocation8], 1
    %s599 = scalar_lea.sflag [#allocation8], 1
    %600 = vsyncpa %s599, 1
    %601 = vsyncpa [#allocation6], 1
    %s602 = scalar_lea.sflag [#allocation6], 1
    %603 = vsyncpa %s602, 1

</llo_original>
